<compile_context>
chip_gen: v7x
topology: tpu7x:2x2x1
jax: 0.10.0
libtpu: 0.0.40
codegen_flags: <defaults>
</compile_context>

<pallas_src>
import math
import functools

import jax
import jax.numpy as jnp
from jax import lax
from jax.experimental import pallas as pl
from jax.experimental.pallas import tpu as pltpu


_NEG_BIG = -1e30   # finite "-inf": fully-masked rows never produce NaN


def _pick_tile(n, target):
    """Largest multiple of 8 that divides n and is <= target (else n itself)."""
    if n <= target:
        return n
    t = (target // 8) * 8
    while t >= 8:
        if n % t == 0:
            return t
        t -= 8
    return n


# ------------------------- fused QKV projection kernel -----------------------

def _qkv_proj_kernel(x_ref, w_ref, b_ref, o_ref):
    acc = jnp.dot(x_ref[...], w_ref[...], preferred_element_type=jnp.float32)
    o_ref[...] = (acc + b_ref[...].astype(jnp.float32)).astype(o_ref.dtype)


def fused_qkv_projection(x2d, w, b, *, tm_target=512):
    """x2d: [M, K], w: [K, Dtot], b: [Dtot] -> [M, Dtot] (y = x @ w + b)."""
    M, K = x2d.shape
    Dtot = w.shape[1]
    tm = _pick_tile(M, tm_target)
    b2 = b.reshape(1, Dtot)
    return pl.pallas_call(
        _qkv_proj_kernel,
        out_shape=jax.ShapeDtypeStruct((M, Dtot), x2d.dtype),
        grid=(M // tm,),
        in_specs=[
            pl.BlockSpec((tm, K), lambda i: (i, 0)),
            pl.BlockSpec((K, Dtot), lambda i: (0, 0)),   # weights stay resident
            pl.BlockSpec((1, Dtot), lambda i: (0, 0)),
        ],
        out_specs=pl.BlockSpec((tm, Dtot), lambda i: (i, 0)),
        compiler_params=pltpu.CompilerParams(
            dimension_semantics=("parallel",),
            vmem_limit_bytes=48 * 1024 * 1024),
    )(x2d, w, b2)


# ------------------------------ attention kernel -----------------------------

def _based_attn_kernel(q_ref, k_ref, v_ref, o_ref,
                       lin_num, lin_den, soft_acc, m_scr, l_scr,
                       *, n_heads, d_proj, d_head, window):
    tq = q_ref.shape[1]
    tk = k_ref.shape[1]
    qi = pl.program_id(1)
    ki = pl.program_id(2)
    nk = pl.num_programs(2)

    @pl.when(ki == 0)
    def _init():
        lin_num[...] = jnp.zeros_like(lin_num)
        lin_den[...] = jnp.zeros_like(lin_den)
        soft_acc[...] = jnp.zeros_like(soft_acc)
        l_scr[...] = jnp.zeros_like(l_scr)
        m_scr[...] = jnp.full_like(m_scr, _NEG_BIG)

    q_start = qi * tq
    k_start = ki * tk

    # Tile-level band pruning (scalar tests on tile offsets).
    tile_is_causal = k_start <= q_start + (tq - 1)
    tile_in_window = k_start + (tk - 1) >= q_start - (window - 1)

    @pl.when(tile_is_causal)
    def _compute():
        in_dtype = q_ref.dtype
        q_all = q_ref[0]            # [tq, H*d_proj]
        k_all = k_ref[0]            # [tk, H*d_proj]
        v_all = v_ref[0]            # [tk, H*d_head]

        # Per-tile masks from tile offsets (no full-N iotas).
        row = q_start + lax.broadcasted_iota(jnp.int32, (tq, tk), 0)
        col = k_start + lax.broadcasted_iota(jnp.int32, (tq, tk), 1)
        diff = row - col
        causal_m = diff >= 0
        win_m = causal_m & (diff <= (window - 1))

        for h in range(n_heads):
            q_h = q_all[:, h * d_proj:(h + 1) * d_proj]
            k_h = k_all[:, h * d_proj:(h + 1) * d_proj]
            v_h = v_all[:, h * d_head:(h + 1) * d_head]

            # g[i, j] = q_i · k_j : contract feature dims directly, f32 acc.
            g = lax.dot_general(q_h, k_h, (((1,), (1,)), ((), ())),
                                preferred_element_type=jnp.float32)

            # Linear ("Based") term: phi(q)·phi(k) = 1 + g + 0.5 g^2, causal.
            a = jnp.where(causal_m, 1.0 + g + 0.5 * g * g, 0.0)
            lin_num[h] += lax.dot_general(
                a.astype(in_dtype), v_h, (((1,), (0,)), ((), ())),
                preferred_element_type=jnp.float32)
            lin_den[h] += jnp.sum(a, axis=-1, keepdims=True)

            # Sliding-window softmax term: only for kv tiles inside the band.
            @pl.when(tile_in_window)
            def _soft():
                s = jnp.where(win_m, g, _NEG_BIG)
                m_prev = m_scr[h]
                m_new = jnp.maximum(m_prev, jnp.max(s, axis=-1, keepdims=True))
                alpha = jnp.exp(m_prev - m_new)
                p = jnp.where(win_m, jnp.exp(s - m_new), 0.0)
                l_scr[h] = alpha * l_scr[h] + jnp.sum(p, axis=-1, keepdims=True)
                soft_acc[h] = alpha * soft_acc[h] + lax.dot_general(
                    p.astype(in_dtype), v_h, (((1,), (0,)), ((), ())),
                    preferred_element_type=jnp.float32)
                m_scr[h] = m_new

    @pl.when(ki == nk - 1)
    def _finalize():
        outs = []
        for h in range(n_heads):
            y_lin = lin_num[h] / (lin_den[h] + 1e-8)
            y_loc = soft_acc[h] / l_scr[h]   # diagonal always in window -> l > 0
            outs.append(y_lin + y_loc)
        # Single lane-dense [tq, H*d_head] store.
        o_ref[0] = jnp.concatenate(outs, axis=-1).astype(o_ref.dtype)


# ---------------------------------- wrapper -----------------------------------

def based_attention_pallas(x, params, *, n_heads, d_proj, d_head, window,
                           tq_target=256, tk_target=256):
    B, N, d_model = x.shape
    H = n_heads
    Dq = H * d_proj
    Dv = H * d_head

    # One fused projection: x is read from HBM once for Q, K and V.
    w_qkv = jnp.concatenate([params["wq"], params["wk"], params["wv"]], axis=1)
    b_qkv = jnp.concatenate([params["bq"], params["bk"], params["bv"]], axis=0)
    qkv = fused_qkv_projection(x.reshape(B * N, d_model), w_qkv, b_qkv)
    qkv = qkv.reshape(B, N, 2 * Dq + Dv)
    # Heads stay packed along the lane dim ([B, N, H*d]); no [B,H,N,d] transposes.
    q = qkv[..., :Dq]
    k = qkv[..., Dq:2 * Dq]
    v = qkv[..., 2 * Dq:]

    tq = _pick_tile(N, tq_target)
    tk = _pick_tile(N, tk_target)

    kernel = functools.partial(
        _based_attn_kernel, n_heads=H, d_proj=d_proj, d_head=d_head, window=window)

    out = pl.pallas_call(
        kernel,
        out_shape=jax.ShapeDtypeStruct((B, N, Dv), x.dtype),
        grid_spec=pltpu.PrefetchScalarGridSpec(
            num_scalar_prefetch=0,
            grid=(B, N // tq, N // tk),
            in_specs=[
                pl.BlockSpec((1, tq, Dq), lambda b, i, j: (b, i, 0)),
                pl.BlockSpec((1, tk, Dq), lambda b, i, j: (b, j, 0)),
                pl.BlockSpec((1, tk, Dv), lambda b, i, j: (b, j, 0)),
            ],
            out_specs=pl.BlockSpec((1, tq, Dv), lambda b, i, j: (b, i, 0)),
            scratch_shapes=[
                pltpu.VMEM((H, tq, d_head), jnp.float32),   # linear numerator
                pltpu.VMEM((H, tq, 1), jnp.float32),        # linear denominator
                pltpu.VMEM((H, tq, d_head), jnp.float32),   # softmax accumulator
                pltpu.VMEM((H, tq, 1), jnp.float32),        # running max m
                pltpu.VMEM((H, tq, 1), jnp.float32),        # running sum l
            ]),
        compiler_params=pltpu.CompilerParams(
            dimension_semantics=("parallel", "parallel", "arbitrary"),
            vmem_limit_bytes=48 * 1024 * 1024),
    )(q, k, v)
    return out   # already [B, N, H*d_head]


# ----------------------------------------------------------- pure-JAX reference

def based_attention_ref(x, params, *, n_heads, d_proj, d_head, window):
    """Literal port of the PyTorch per-position recurrence (for verification)."""
    B, N, d_model = x.shape
    H = n_heads
    lin = lambda a, w, b: a @ w + b
    Q = lin(x, params["wq"], params["bq"]).reshape(B, N, H, d_proj).transpose(0, 2, 1, 3)
    K = lin(x, params["wk"], params["bk"]).reshape(B, N, H, d_proj).transpose(0, 2, 1, 3)
    V = lin(x, params["wv"], params["bv"]).reshape(B, N, H, d_head).transpose(0, 2, 1, 3)
    d_tilde = 1 + d_proj + d_proj * d_proj
    s = jnp.zeros((B, H, d_tilde, d_head), x.dtype)
    z = jnp.zeros((B, H, d_tilde), x.dtype)
    sqrt_half = 1.0 / math.sqrt(2.0)
    outs = []
    for i in range(N):
        q_i, k_i, v_i = Q[:, :, i, :], K[:, :, i, :], V[:, :, i, :]
        one = jnp.ones((B, H, 1), x.dtype)
        outer_kk = k_i[..., :, None] * k_i[..., None, :]
        phi_k = jnp.concatenate([one, k_i, outer_kk.reshape(B, H, -1) * sqrt_half], axis=-1)
        z = z + phi_k
        s = s + phi_k[..., None] * v_i[..., None, :]
        outer_qq = q_i[..., :, None] * q_i[..., None, :]
        phi_q = jnp.concatenate([one, q_i, outer_qq.reshape(B, H, -1) * sqrt_half], axis=-1)
        numer = (phi_q[..., None] * s).sum(axis=-2)
        denom = (phi_q * z).sum(axis=-1, keepdims=True) + 1e-8
        y_linear = numer / denom
        start = max(0, i - window + 1)
        K_win, V_win = K[:, :, start:i + 1, :], V[:, :, start:i + 1, :]
        scores = (q_i[..., None, :] * K_win).sum(axis=-1)
        weights = jax.nn.softmax(scores, axis=-1)
        y_local = (weights[..., None] * V_win).sum(axis=-2)
        outs.append(y_linear + y_local)
    out = jnp.stack(outs, axis=2)  # [B, H, N, d_head]
    return out.transpose(0, 2, 1, 3).reshape(B, N, H * d_head)


# --------------------------------------------------------------------- main --

if __name__ == "__main__":
    B, N, d_model = 2, 8, 32
    n_heads = 2
    d_head = d_model // n_heads          # 16
    d_proj = d_head                      # default (d_proj=None)
    window = 4

    key = jax.random.PRNGKey(0)
    kx, kq, kk, kv, kbq, kbk, kbv = jax.random.split(key, 7)
    scale = 1.0 / math.sqrt(d_model)
    params = {
        "wq": jax.random.normal(kq, (d_model, n_heads * d_proj), jnp.float32) * scale,
        "bq": jax.random.normal(kbq, (n_heads * d_proj,), jnp.float32) * 0.01,
        "wk": jax.random.normal(kk, (d_model, n_heads * d_proj), jnp.float32) * scale,
        "bk": jax.random.normal(kbk, (n_heads * d_proj,), jnp.float32) * 0.01,
        "wv": jax.random.normal(kv, (d_model, n_heads * d_head), jnp.float32) * scale,
        "bv": jax.random.normal(kbv, (n_heads * d_head,), jnp.float32) * 0.01,
    }
    x = jax.random.normal(kx, (B, N, d_model), jnp.float32)

    out = based_attention_pallas(
        x, params, n_heads=n_heads, d_proj=d_proj, d_head=d_head, window=window)
    out = jax.block_until_ready(out)

    ref = based_attention_ref(
        x, params, n_heads=n_heads, d_proj=d_proj, d_head=d_head, window=window)

    assert out.shape == (B, N, n_heads * d_head), out.shape
    assert jnp.allclose(out, ref, rtol=1e-4, atol=1e-4), (
        float(jnp.max(jnp.abs(out - ref))))

    print("KERNEL_OK")
</pallas_src>

<mosaic_0001>
module attributes {stable_mosaic.version = 11 : i64} {
  func.func @_qkv_proj_kernel(%arg0: i32, %arg1: memref<16x32xf32, #tpu.memory_space<vmem>>, %arg2: memref<32x96xf32, #tpu.memory_space<vmem>>, %arg3: memref<1x96xf32, #tpu.memory_space<vmem>>, %arg4: memref<16x96xf32, #tpu.memory_space<vmem>>) attributes {dimension_semantics = [#tpu.dimension_semantics<parallel>], iteration_bounds = array<i64: 1>, scalar_prefetch = 0 : i64, scratch_operands = 0 : i64, tpu.core_type = #tpu.core_type<tc>, window_params = [{transform_indices = @transform_0, window_bounds = array<i64: 16, 32>}, {pipeline_mode = #tpu.pipeline_mode<synchronous>, transform_indices = @transform_1, window_bounds = array<i64: 32, 96>}, {pipeline_mode = #tpu.pipeline_mode<synchronous>, transform_indices = @transform_2, window_bounds = array<i64: 1, 96>}, {transform_indices = @transform_3, window_bounds = array<i64: 16, 96>}]} {
    %c0 = arith.constant 0 : index
    %c0_0 = arith.constant 0 : index
    %0 = vector.load %arg1[%c0, %c0_0] : memref<16x32xf32, #tpu.memory_space<vmem>>, vector<16x32xf32>
    %c0_1 = arith.constant 0 : index
    %c0_2 = arith.constant 0 : index
    %1 = vector.load %arg2[%c0_1, %c0_2] : memref<32x96xf32, #tpu.memory_space<vmem>>, vector<32x96xf32>
    %cst = arith.constant dense<0.000000e+00> : vector<16x96xf32>
    %2 = tpu.matmul %0, %1, %cst {dimension_numbers = #tpu.dot_dimension_numbers<[1], [0], [0], [1], [0, 0, 1, 1], [], []>} : vector<16x32xf32>, vector<32x96xf32>, vector<16x96xf32> -> vector<16x96xf32>
    %c0_3 = arith.constant 0 : index
    %c0_4 = arith.constant 0 : index
    %3 = vector.load %arg3[%c0_3, %c0_4] : memref<1x96xf32, #tpu.memory_space<vmem>>, vector<1x96xf32>
    %4 = vector.broadcast %3 : vector<1x96xf32> to vector<16x96xf32>
    %5 = arith.addf %2, %4 : vector<16x96xf32>
    %c0_5 = arith.constant 0 : index
    %c0_6 = arith.constant 0 : index
    %6 = vector.load %arg4[%c0_5, %c0_6] : memref<16x96xf32, #tpu.memory_space<vmem>>, vector<16x96xf32>
    tpu.vector_store %arg4[%c0_5, %c0_6], %5 {strides = array<i32>} : memref<16x96xf32, #tpu.memory_space<vmem>>, vector<16x96xf32>,
    return
  }
  func.func @transform_0(%arg0: i32) -> (i32, i32) {
    %c0_i32 = arith.constant 0 : i32
    %c0_i32_0 = arith.constant 0 : i32
    return %arg0, %c0_i32 : i32, i32
  }
  func.func @transform_1(%arg0: i32) -> (i32, i32) {
    %c0_i32 = arith.constant 0 : i32
    %c0_i32_0 = arith.constant 0 : i32
    %c0_i32_1 = arith.constant 0 : i32
    return %c0_i32, %c0_i32_0 : i32, i32
  }
  func.func @transform_2(%arg0: i32) -> (i32, i32) {
    %c0_i32 = arith.constant 0 : i32
    %c0_i32_0 = arith.constant 0 : i32
    %c0_i32_1 = arith.constant 0 : i32
    return %c0_i32, %c0_i32_0 : i32, i32
  }
  func.func @transform_3(%arg0: i32) -> (i32, i32) {
    %c0_i32 = arith.constant 0 : i32
    %c0_i32_0 = arith.constant 0 : i32
    return %arg0, %c0_i32 : i32, i32
  }
}

</mosaic_0001>

<llo_original>
// kernel: tpu_custom_call.1
$region0: #{tpu_custom_call.1}
  #allocation0 [shape = 'u32[]', space=smem, size = 0x4, offset = 0x4, fixed_abs, tag = 'smem constant byte address 0x4 - core index']
  #allocation1 [shape = 'u32[144,128]{1,0:T(1,128)}', space=vmem, size = 0x12000, scoped, tag = 'internal scratch']
  %s0 = inlined_call_operand.hbm [shape: f32[16,32], index: 0, kind: input, shape index: {}]
  %s1 = inlined_call_operand.hbm [shape: f32[32,96], index: 1, kind: input, shape index: {}]
  %s2 = inlined_call_operand.vmem [shape: f32[1,96], index: 2, kind: input, shape index: {}]
  %s3 = inlined_call_operand.hbm [shape: f32[16,96], index: 3, kind: output, shape index: {}]
  %s4 = sld [smem:[#allocation0]]
  $region30: #{tpu_custom_call.1} parent=0
    _
  %s6 = ssub.s32 1, %s4
  %s7 = scalar_select 0, %s6, %s4
  $region1: #{tpu_custom_call.1} parent=0
    #allocation2 [shape = 'u8[8192]{0}', space=vmem, size = 0x2000, scoped, tag = 'input window, operand 0, single buffered']
    #allocation3 [shape = 's32[1]{0}', space=sflag, size = 0x4, scoped, tag = 'scoped memory for tpu_custom_call.1']
    #allocation4 [shape = 's32[1]{0}', space=sflag, size = 0x4, scoped, tag = 'scoped memory for tpu_custom_call.1']
    #allocation5 [shape = 'u8[16384]{0}', space=vmem, size = 0x4000, scoped, tag = 'input window, operand 1, single buffered']
    #allocation6 [shape = 's32[1]{0}', space=sflag, size = 0x4, scoped, tag = 'scoped memory for tpu_custom_call.1']
    #allocation7 [shape = 'u8[8192]{0}', space=vmem, size = 0x2000, scoped, tag = 'output window, operand 0, single buffered']
    %8 = vsyncpa [#allocation3], 0
    %9 = vsyncpa [#allocation6], 0
    %10 = vsyncpa [#allocation4], 0
    // Predicated region
    $region2: #{tpu_custom_call.1} parent=1 // pred_check
      _
    $region3: #{tpu_custom_call.1} parent=1 // pred_check_branch
      %12 = sbr.rel (0) target = $region5
    $region4: #{tpu_custom_call.1} parent=1 // pred_region
      %s14 = ssub.s32 256, 256
      %15 = vsyncadd [#allocation3], %s14
      %s16 = sshll.u32 [#allocation2], 4
      %s17 = int_to_ptr.vmem [resolvable:$true] %s16
      %22 = dma.hbm_to_vmem [thread:$0]  %s0, 256, %s17, [#allocation3], 128, 128, 8
    $region5: #{tpu_custom_call.1} parent=1 // pred_fallthru
      _
    // Predicated region
    $region6: #{tpu_custom_call.1} parent=1 // pred_check
      _
    $region7: #{tpu_custom_call.1} parent=1 // pred_check_branch
      %24 = sbr.rel (0) target = $region9
    $region8: #{tpu_custom_call.1} parent=1 // pred_region
      %s26 = ssub.s32 512, 512
      %27 = vsyncadd [#allocation6], %s26
      %s28 = sshll.u32 [#allocation5], 4
      %s29 = int_to_ptr.vmem [resolvable:$true] %s28
      %34 = dma.hbm_to_vmem [thread:$0]  %s1, 512, %s29, [#allocation6], 128, 128, 8
    $region9: #{tpu_custom_call.1} parent=1 // pred_fallthru
      _
    // Predicated region
    $region10: #{tpu_custom_call.1} parent=1 // pred_check
      _
    $region11: #{tpu_custom_call.1} parent=1 // pred_check_branch
      %36 = sbr.rel (0) target = $region13
    $region12: #{tpu_custom_call.1} parent=1 // pred_region
      _
    $region13: #{tpu_custom_call.1} parent=1 // pred_fallthru
      _
    // Predicated region
    $region14: #{tpu_custom_call.1} parent=1 // pred_check
      _
    $region15: #{tpu_custom_call.1} parent=1 // pred_check_branch
      %38 = sbr.rel (0) target = $region17
    $region16: #{tpu_custom_call.1} parent=1 // pred_region
      %39 = dma.done [#allocation3], 256
    $region17: #{tpu_custom_call.1} parent=1 // pred_fallthru
      _
    // Predicated region
    $region18: #{tpu_custom_call.1} parent=1 // pred_check
      _
    $region19: #{tpu_custom_call.1} parent=1 // pred_check_branch
      %41 = sbr.rel (0) target = $region21
    $region20: #{tpu_custom_call.1} parent=1 // pred_region
      %42 = dma.done [#allocation6], 512
    $region21: #{tpu_custom_call.1} parent=1 // pred_fallthru
      _
    %v43 = vld [vmem:[#allocation2] sm:$0xff]
    %v44 = vld [vmem:[#allocation2 + $0x8] sm:$0xff]
    %v45 = vld [vmem:[#allocation5] sm:$0xff]
    %v46 = vld [vmem:[#allocation5 + $0x8] sm:$0xff]
    %v47 = vld [vmem:[#allocation5 + $0x10] sm:$0xff]
    %v48 = vld [vmem:[#allocation5 + $0x18] sm:$0xff]
    %v49 = vld [vmem:[%s2] sm:$0x1]
    %v51 = vlaneseq
    %v52 = vshrl.u32 %v51, 7
    %v53 = vsub.s32 0, %v52
    %v54 = vrot.slane %v49, %v53
    %vm56 = vcmask 261120
    %v58 = vsel %vm56, %v43, 0
    %v61 = vsel %vm56, %v44, 0
    %63 = vmatprep.subr.mxu0 0.0
    %64 = vmatpush1.msra.mxu0 %v45
    %65 = vmatprep.subr.mxu0 0.0
    %66 = vmatpush1.msra.mxu0 %v46
    %67 = vmatprep.subr.mxu0 0.0
    %68 = vmatpush1.msra.mxu0 %v47
    %69 = vmatprep.subr.mxu0 0.0
    %70 = vmatpush1.msra.mxu0 %v48
    %71 = vmatprep.subr.mxu0 0.0
    %72 = vmatpush1.msra.mxu0 0.0
    %73 = vmatprep.subr.mxu0 0.0
    %74 = vmatpush1.msra.mxu0 0.0
    %75 = vmatprep.subr.mxu0 0.0
    %76 = vmatpush1.msra.mxu0 0.0
    %77 = vmatprep.subr.mxu0 0.0
    %78 = vmatpush1.msra.mxu0 0.0
    %79 = vmatprep.subr.mxu0 0.0
    %80 = vmatpush1.msra.mxu0 0.0
    %81 = vmatprep.subr.mxu0 0.0
    %82 = vmatpush1.msra.mxu0 0.0
    %83 = vmatprep.subr.mxu0 0.0
    %84 = vmatpush1.msra.mxu0 0.0
    %85 = vmatprep.subr.mxu0 0.0
    %86 = vmatpush1.msra.mxu0 0.0
    %87 = vmatprep.subr.mxu0 0.0
    %88 = vmatpush1.msra.mxu0 0.0
    %89 = vmatprep.subr.mxu0 0.0
    %90 = vmatpush1.msra.mxu0 0.0
    %91 = vmatprep.subr.mxu0 0.0
    %92 = vmatpush1.msra.mxu0 0.0
    %93 = vmatprep.subr.mxu0 0.0
    %94 = vmatpush1.msra.mxu0 0.0
    %95 = vmatprep.subr.mxu0 0.0
    %96 = vmatpush1.msra.mxu0 0.0
    %97 = vmatprep.subr.mxu0 0.0
    %98 = vmatpush1.msra.mxu0 0.0
    %99 = vmatprep.subr.mxu0 0.0
    %100 = vmatpush1.msra.mxu0 0.0
    %101 = vmatprep.subr.mxu0 0.0
    %102 = vmatpush1.msra.mxu0 0.0
    %103 = vmatprep.subr.mxu0 0.0
    %104 = vmatpush1.msra.mxu0 0.0
    %105 = vmatprep.subr.mxu0 0.0
    %106 = vmatpush1.msra.mxu0 0.0
    %107 = vmatprep.subr.mxu0 0.0
    %108 = vmatpush1.msra.mxu0 0.0
    %109 = vmatprep.subr.mxu0 0.0
    %110 = vmatpush1.msra.mxu0 0.0
    %111 = vmatprep.subr.mxu0 0.0
    %112 = vmatpush1.msra.mxu0 0.0
    %113 = vmatprep.subr.mxu0 0.0
    %114 = vmatpush1.msra.mxu0 0.0
    %115 = vmatprep.subr.mxu0 0.0
    %116 = vmatpush1.msra.mxu0 0.0
    %117 = vmatprep.subr.mxu0 0.0
    %118 = vmatpush1.msra.mxu0 0.0
    %119 = vmatprep.subr.mxu0 0.0
    %120 = vmatpush1.msra.mxu0 0.0
    %121 = vmatprep.subr.mxu0 0.0
    %122 = vmatpush1.msra.mxu0 0.0
    %123 = vmatprep.subr.mxu0 0.0
    %124 = vmatpush1.msra.mxu0 0.0
    %125 = vmatprep.subr.mxu0 0.0
    %126 = vmatpush1.msra.mxu0 0.0
    %127 = vmatprep.mubr.f32.mxu0 0.0
    %128 = vmatmul.mubr.f32.gmra.mrb[0].mxu0 %v58
    %v129 = vpop.f32.mrb[0].mxu0
    %v130 = vadd.f32 %v54, %v129
    %v131 = vpop.f32.mrb[0].mxu0
    %132 = vmatprep.mubr.f32.mxu0 0.0
    %133 = vmatmul.mubr.f32.gmra.mrb[0].mxu0 %v61
    %v134 = vpop.f32.mrb[0].mxu0
    %v135 = vadd.f32 %v54, %v134
    %v136 = vpop.f32.mrb[0].mxu0
    %137 = vdwg.mxu0
    %vm138 = vcmask 785408
    %139 = vst.msk [vmem:[#allocation7] sm:$0xff] %vm138, %v130
    %140 = vst.msk [vmem:[#allocation7 + $0x8] sm:$0xff] %vm138, %v135
    // Predicated region
    $region22: #{tpu_custom_call.1} parent=1 // pred_check
      _
    $region23: #{tpu_custom_call.1} parent=1 // pred_check_branch
      %142 = sbr.rel (0) target = $region25
    $region24: #{tpu_custom_call.1} parent=1 // pred_region
      %s144 = ssub.s32 256, 256
      %145 = vsyncadd [#allocation4], %s144
      %s146 = sshll.u32 [#allocation7], 4
      %s147 = int_to_ptr.vmem [resolvable:$true] %s146
      %152 = dma.vmem_to_hbm [thread:$0]  %s147, 256, %s3, [#allocation4], 128, 128, 8
    $region25: #{tpu_custom_call.1} parent=1 // pred_fallthru
      _
    // Predicated region
    $region26: #{tpu_custom_call.1} parent=1 // pred_check
      _
    $region27: #{tpu_custom_call.1} parent=1 // pred_check_branch
      %154 = sbr.rel (0) target = $region29
    $region28: #{tpu_custom_call.1} parent=1 // pred_region
      %155 = dma.done [#allocation4], 256
    $region29: #{tpu_custom_call.1} parent=1 // pred_fallthru
      _
    %156 = vsyncpa [#allocation3], 1
    %157 = vsyncpa [#allocation6], 1
    %158 = vsyncpa [#allocation4], 1

</llo_original>
